<compile_context>
chip_gen: v5e
topology: v5e:2x2
jax: 0.10.0
libtpu: 0.0.40
codegen_flags: <defaults>
</compile_context>

<pallas_src>
import functools

import jax
import jax.numpy as jnp
from jax.experimental import pallas as pl
from jax.experimental.pallas import tpu as pltpu


def _round_up(a, b):
    return (a + b - 1) // b * b


def _tpu_plan():
    """Generation-aware row tile, VMEM budget and GELU flavor."""
    kind = ""
    try:
        kind = jax.devices()[0].device_kind.lower()
    except Exception:
        pass
    if "7" in kind:
        # v7x: 64 MiB VMEM per TC -> modest tile + headroom; tanh GELU (EUP).
        return dict(tm=256, vmem_bytes=48 * 1024 * 1024, exact_gelu=False)
    if "v6" in kind:
        # v6e: 128 MiB VMEM, bf16 EUP -> bigger tile, tanh GELU (EUP slot).
        return dict(tm=512, vmem_bytes=100 * 1024 * 1024, exact_gelu=False)
    if any(t in kind for t in ("v2", "v3", "v4", "v5")):
        # v5e and older: MXU-bound; exact erf hides under the matmuls.
        return dict(tm=512, vmem_bytes=100 * 1024 * 1024, exact_gelu=True)
    # Unknown device: conservative VMEM budget, tanh GELU.
    return dict(tm=256, vmem_bytes=48 * 1024 * 1024, exact_gelu=False)


def _ffn_kernel(x_ref, gamma_ref, beta_ref, w12_ref, b12_ref, w2_ref, b2_ref,
                o_ref, *, eps, inter, exact_gelu):
    # ---- pre LayerNorm in f32 (biased variance, like torch.nn.LayerNorm) ----
    x = x_ref[...].astype(jnp.float32)                                # [tm, H]
    mean = jnp.mean(x, axis=-1, keepdims=True)
    centered = x - mean
    var = jnp.mean(centered * centered, axis=-1, keepdims=True)
    inv = jax.lax.rsqrt(var + eps)
    y = centered * inv * gamma_ref[...] + beta_ref[...]               # [tm, H] f32

    # ---- fused dense_1 || gate: one bf16 MXU matmul, f32 accumulation ----
    y_lo = y.astype(w12_ref.dtype)
    h12 = jnp.dot(y_lo, w12_ref[...],
                  preferred_element_type=jnp.float32) + b12_ref[...]  # [tm, 2I] f32
    h1 = h12[:, :inter]          # `inter` is padded to a multiple of 128 ->
    hg = h12[:, inter:]          # lane-aligned split, no XLU shuffles.
    if exact_gelu:
        # v5e and older: exact erf (matches nn.GELU()); hides under the MXU.
        hg = 0.5 * hg * (1.0 + jax.lax.erf(hg * (2.0 ** -0.5)))
    else:
        # v6e / v7x: tanh-approx GELU -> transcendental lands on the EUP slot,
        # leaving the VALU well under MXU time.
        c = 0.7978845608028654  # sqrt(2/pi)
        hg = 0.5 * hg * (1.0 + jnp.tanh(c * (hg + 0.044715 * (hg * hg * hg))))
    h = (h1 * hg).astype(w2_ref.dtype)                                # [tm, I] bf16

    # ---- dense_2 (I -> H) ----
    out = jnp.dot(h, w2_ref[...],
                  preferred_element_type=jnp.float32) + b2_ref[...]
    o_ref[...] = out.astype(o_ref.dtype)


def modern_bert_ffn(x, params, *, eps=1e-5, tm=None):
    """x: [B, S, H]. params: see init_params (W1||Wg fused, bf16 weights)."""
    B, S, H = x.shape
    M = B * S
    inter = params["w2"].shape[0]          # padded intermediate (mult. of 128)
    i2 = params["w12"].shape[1]            # 2 * padded intermediate

    plan = _tpu_plan()
    tm = plan["tm"] if tm is None else tm
    # Row tile: multiple of 8, clamped for tiny inputs. No wrapper-side pad;
    # the final block may be ragged (Pallas masks OOB stores, ops are row-wise).
    tm_eff = min(tm, _round_up(M, 8))
    grid = (pl.cdiv(M, tm_eff),)

    x2 = x.reshape(M, H)
    full = lambda i: (0, 0)   # weights / norm params: constant block index

    def _run(single_buffer_weights):
        # Resident blocks never change index -> single buffer saves VMEM.
        resident = ({"pipeline_mode": pl.Buffered(1)}
                    if single_buffer_weights else {})
        return pl.pallas_call(
            functools.partial(_ffn_kernel, eps=eps, inter=inter,
                              exact_gelu=plan["exact_gelu"]),
            out_shape=jax.ShapeDtypeStruct((M, H), x.dtype),
            grid_spec=pltpu.PrefetchScalarGridSpec(
                num_scalar_prefetch=0,
                grid=grid,
                in_specs=[
                    pl.BlockSpec((tm_eff, H), lambda i: (i, 0)),        # x rows
                    pl.BlockSpec((1, H), full, **resident),             # ln gamma
                    pl.BlockSpec((1, H), full, **resident),             # ln beta
                    pl.BlockSpec((H, i2), full, **resident),            # W1 || Wg
                    pl.BlockSpec((1, i2), full, **resident),            # b1 || bg
                    pl.BlockSpec((inter, H), full, **resident),         # W2
                    pl.BlockSpec((1, H), full, **resident),             # b2
                ],
                out_specs=pl.BlockSpec((tm_eff, H), lambda i: (i, 0)),
            ),
            compiler_params=pltpu.CompilerParams(
                # Row axis is embarrassingly parallel -> megacore sharding.
                dimension_semantics=("parallel",),
                # Generation-aware budget: 48 MiB on v7x (64 MiB physical per
                # TC, leave headroom), ~100 MiB on v5e/v6e (128 MiB physical).
                vmem_limit_bytes=plan["vmem_bytes"],
            ),
        )(
            x2,
            params["ln_gamma"], params["ln_beta"],
            params["w12"], params["b12"],
            params["w2"], params["b2"],
        )

    try:
        out = _run(True)
    except Exception:
        # pl.Buffered(1) not supported by this JAX/Mosaic build -> default
        # double-buffered resident blocks (correct, slightly more VMEM).
        out = _run(False)
    return out.reshape(B, S, H)


def init_params(key, hidden_size, intermediate_size, *, weight_dtype=jnp.bfloat16):
    """Deterministic synthetic parameters.

    Weights are stored as [in, out] (transposed vs torch nn.Linear), with
    dense_1 and gate fused column-wise into w12 = [H, 2*I_pad] (first I_pad
    columns = dense_1, last I_pad = gate) and biases fused likewise, where
    I_pad = round_up(I, 128) so the in-kernel GLU split is lane-aligned.
    Padded channels are exactly zero (gelu(0)=0 -> zero contribution).
    Matmul weights are bf16 (MXU operands); norm params and biases stay f32.
    """
    H, I = hidden_size, intermediate_size
    I_pad = _round_up(I, 128)
    ks = jax.random.split(key, 6)
    scale = 0.02
    w1 = scale * jax.random.normal(ks[0], (H, I), jnp.float32)
    b1 = scale * jax.random.normal(ks[1], (1, I), jnp.float32)
    wg = scale * jax.random.normal(ks[2], (H, I), jnp.float32)
    bg = scale * jax.random.normal(ks[3], (1, I), jnp.float32)
    w2 = scale * jax.random.normal(ks[4], (I, H), jnp.float32)
    b2 = scale * jax.random.normal(ks[5], (1, H), jnp.float32)

    pad_cols = ((0, 0), (0, I_pad - I))
    w1p, wgp = jnp.pad(w1, pad_cols), jnp.pad(wg, pad_cols)
    b1p, bgp = jnp.pad(b1, pad_cols), jnp.pad(bg, pad_cols)
    w2p = jnp.pad(w2, ((0, I_pad - I), (0, 0)))

    return {
        "ln_gamma": jnp.ones((1, H), jnp.float32),
        "ln_beta": jnp.zeros((1, H), jnp.float32),
        "w12": jnp.concatenate([w1p, wgp], axis=1).astype(weight_dtype),
        "b12": jnp.concatenate([b1p, bgp], axis=1),
        "w2": w2p.astype(weight_dtype),
        "b2": b2,
    }


def _reference(x, params, eps=1e-5):
    """Pure-JAX reference (exact-erf GELU as in nn.GELU(); f32 activations,
    bf16 weights upcast to f32). Padded channels contribute exactly zero."""
    I = params["w2"].shape[0]
    w12 = params["w12"].astype(jnp.float32)
    w2 = params["w2"].astype(jnp.float32)
    mean = jnp.mean(x, axis=-1, keepdims=True)
    var = jnp.mean((x - mean) ** 2, axis=-1, keepdims=True)
    y = (x - mean) * jax.lax.rsqrt(var + eps) * params["ln_gamma"][0] + params["ln_beta"][0]
    h12 = y @ w12 + params["b12"][0]
    h1, hg = h12[..., :I], h12[..., I:]
    hg = 0.5 * hg * (1.0 + jax.lax.erf(hg / jnp.sqrt(2.0)))
    return (h1 * hg) @ w2 + params["b2"][0]


if __name__ == "__main__":
    batch, seq, hidden, intermediate = 2, 8, 32, 64
    key = jax.random.PRNGKey(0)
    k_x, k_p = jax.random.split(key)
    x = jax.random.normal(k_x, (batch, seq, hidden), jnp.float32)
    params = init_params(k_p, hidden, intermediate)

    out = jax.block_until_ready(modern_bert_ffn(x, params))

    ref = _reference(x, params)
    assert out.shape == (batch, seq, hidden)
    max_err = float(jnp.max(jnp.abs(out - ref)))
    # bf16 MXU operands (f32 accumulation) + possible tanh-approx GELU on
    # v6e/v7x -> slightly relaxed tolerance.
    assert jnp.allclose(out, ref, atol=3e-3, rtol=2e-2), f"max abs err {max_err}"
    print("KERNEL_OK")
</pallas_src>

<mosaic_0001>
module attributes {stable_mosaic.version = 11 : i64} {
  func.func @_ffn_kernel(%arg0: i32, %arg1: memref<16x32xf32, #tpu.memory_space<vmem>>, %arg2: memref<1x32xf32, #tpu.memory_space<vmem>>, %arg3: memref<1x32xf32, #tpu.memory_space<vmem>>, %arg4: memref<32x256xbf16, #tpu.memory_space<vmem>>, %arg5: memref<1x256xf32, #tpu.memory_space<vmem>>, %arg6: memref<128x32xbf16, #tpu.memory_space<vmem>>, %arg7: memref<1x32xf32, #tpu.memory_space<vmem>>, %arg8: memref<16x32xf32, #tpu.memory_space<vmem>>) attributes {dimension_semantics = [#tpu.dimension_semantics<parallel>], iteration_bounds = array<i64: 1>, scalar_prefetch = 0 : i64, scratch_operands = 0 : i64, tpu.core_type = #tpu.core_type<tc>, window_params = [{transform_indices = @transform_0, window_bounds = array<i64: 16, 32>}, {pipeline_mode = #tpu.pipeline_mode<synchronous>, transform_indices = @transform_1, window_bounds = array<i64: 1, 32>}, {pipeline_mode = #tpu.pipeline_mode<synchronous>, transform_indices = @transform_2, window_bounds = array<i64: 1, 32>}, {pipeline_mode = #tpu.pipeline_mode<synchronous>, transform_indices = @transform_3, window_bounds = array<i64: 32, 256>}, {pipeline_mode = #tpu.pipeline_mode<synchronous>, transform_indices = @transform_4, window_bounds = array<i64: 1, 256>}, {pipeline_mode = #tpu.pipeline_mode<synchronous>, transform_indices = @transform_5, window_bounds = array<i64: 128, 32>}, {pipeline_mode = #tpu.pipeline_mode<synchronous>, transform_indices = @transform_6, window_bounds = array<i64: 1, 32>}, {transform_indices = @transform_7, window_bounds = array<i64: 16, 32>}]} {
    %c0 = arith.constant 0 : index
    %c0_0 = arith.constant 0 : index
    %0 = vector.load %arg1[%c0, %c0_0] : memref<16x32xf32, #tpu.memory_space<vmem>>, vector<16x32xf32>
    %cst = arith.constant dense<0.000000e+00> : vector<16xf32>
    %1 = vector.multi_reduction <add>, %0, %cst [1] : vector<16x32xf32> to vector<16xf32>
    %2 = vector.shape_cast %1 : vector<16xf32> to vector<16x1xf32>
    %cst_1 = arith.constant 3.200000e+01 : f32
    %3 = vector.broadcast %cst_1 : f32 to vector<16x1xf32>
    %4 = arith.divf %2, %3 : vector<16x1xf32>
    %5 = vector.broadcast %4 : vector<16x1xf32> to vector<16x32xf32>
    %6 = arith.subf %0, %5 : vector<16x32xf32>
    %7 = arith.mulf %6, %6 : vector<16x32xf32>
    %cst_2 = arith.constant dense<0.000000e+00> : vector<16xf32>
    %8 = vector.multi_reduction <add>, %7, %cst_2 [1] : vector<16x32xf32> to vector<16xf32>
    %9 = vector.shape_cast %8 : vector<16xf32> to vector<16x1xf32>
    %cst_3 = arith.constant 3.200000e+01 : f32
    %10 = vector.broadcast %cst_3 : f32 to vector<16x1xf32>
    %11 = arith.divf %9, %10 : vector<16x1xf32>
    %cst_4 = arith.constant 9.99999974E-6 : f32
    %12 = vector.broadcast %cst_4 : f32 to vector<16x1xf32>
    %13 = arith.addf %11, %12 : vector<16x1xf32>
    %14 = math.rsqrt %13 : vector<16x1xf32>
    %15 = vector.broadcast %14 : vector<16x1xf32> to vector<16x32xf32>
    %16 = arith.mulf %6, %15 : vector<16x32xf32>
    %c0_5 = arith.constant 0 : index
    %c0_6 = arith.constant 0 : index
    %17 = vector.load %arg2[%c0_5, %c0_6] : memref<1x32xf32, #tpu.memory_space<vmem>>, vector<1x32xf32>
    %18 = vector.broadcast %17 : vector<1x32xf32> to vector<16x32xf32>
    %19 = arith.mulf %16, %18 : vector<16x32xf32>
    %c0_7 = arith.constant 0 : index
    %c0_8 = arith.constant 0 : index
    %20 = vector.load %arg3[%c0_7, %c0_8] : memref<1x32xf32, #tpu.memory_space<vmem>>, vector<1x32xf32>
    %21 = vector.broadcast %20 : vector<1x32xf32> to vector<16x32xf32>
    %22 = arith.addf %19, %21 : vector<16x32xf32>
    %23 = arith.truncf %22 : vector<16x32xf32> to vector<16x32xbf16>
    %c0_9 = arith.constant 0 : index
    %c0_10 = arith.constant 0 : index
    %24 = vector.load %arg4[%c0_9, %c0_10] : memref<32x256xbf16, #tpu.memory_space<vmem>>, vector<32x256xbf16>
    %cst_11 = arith.constant dense<0.000000e+00> : vector<16x256xf32>
    %25 = tpu.matmul %23, %24, %cst_11 {dimension_numbers = #tpu.dot_dimension_numbers<[1], [0], [0], [1], [0, 0, 1, 1], [], []>} : vector<16x32xbf16>, vector<32x256xbf16>, vector<16x256xf32> -> vector<16x256xf32>
    %c0_12 = arith.constant 0 : index
    %c0_13 = arith.constant 0 : index
    %26 = vector.load %arg5[%c0_12, %c0_13] : memref<1x256xf32, #tpu.memory_space<vmem>>, vector<1x256xf32>
    %27 = vector.broadcast %26 : vector<1x256xf32> to vector<16x256xf32>
    %28 = arith.addf %25, %27 : vector<16x256xf32>
    %29 = vector.extract_strided_slice %28 {offsets = [0, 0], sizes = [16, 128], strides = [1, 1]} : vector<16x256xf32> to vector<16x128xf32>
    %30 = vector.extract_strided_slice %28 {offsets = [0, 128], sizes = [16, 128], strides = [1, 1]} : vector<16x256xf32> to vector<16x128xf32>
    %cst_14 = arith.constant 5.000000e-01 : f32
    %31 = vector.broadcast %cst_14 : f32 to vector<16x128xf32>
    %32 = arith.mulf %31, %30 : vector<16x128xf32>
    %33 = arith.mulf %30, %30 : vector<16x128xf32>
    %34 = arith.mulf %33, %30 : vector<16x128xf32>
    %cst_15 = arith.constant 4.471500e-02 : f32
    %35 = vector.broadcast %cst_15 : f32 to vector<16x128xf32>
    %36 = arith.mulf %35, %34 : vector<16x128xf32>
    %37 = arith.addf %30, %36 : vector<16x128xf32>
    %cst_16 = arith.constant 0.797884583 : f32
    %38 = vector.broadcast %cst_16 : f32 to vector<16x128xf32>
    %39 = arith.mulf %38, %37 : vector<16x128xf32>
    %40 = math.tanh %39 : vector<16x128xf32>
    %cst_17 = arith.constant 1.000000e+00 : f32
    %41 = vector.broadcast %cst_17 : f32 to vector<16x128xf32>
    %42 = arith.addf %41, %40 : vector<16x128xf32>
    %43 = arith.mulf %32, %42 : vector<16x128xf32>
    %44 = arith.mulf %29, %43 : vector<16x128xf32>
    %45 = arith.truncf %44 : vector<16x128xf32> to vector<16x128xbf16>
    %c0_18 = arith.constant 0 : index
    %c0_19 = arith.constant 0 : index
    %46 = vector.load %arg6[%c0_18, %c0_19] : memref<128x32xbf16, #tpu.memory_space<vmem>>, vector<128x32xbf16>
    %cst_20 = arith.constant dense<0.000000e+00> : vector<16x32xf32>
    %47 = tpu.matmul %45, %46, %cst_20 {dimension_numbers = #tpu.dot_dimension_numbers<[1], [0], [0], [1], [0, 0, 1, 1], [], []>} : vector<16x128xbf16>, vector<128x32xbf16>, vector<16x32xf32> -> vector<16x32xf32>
    %c0_21 = arith.constant 0 : index
    %c0_22 = arith.constant 0 : index
    %48 = vector.load %arg7[%c0_21, %c0_22] : memref<1x32xf32, #tpu.memory_space<vmem>>, vector<1x32xf32>
    %49 = vector.broadcast %48 : vector<1x32xf32> to vector<16x32xf32>
    %50 = arith.addf %47, %49 : vector<16x32xf32>
    %c0_23 = arith.constant 0 : index
    %c0_24 = arith.constant 0 : index
    %51 = vector.load %arg8[%c0_23, %c0_24] : memref<16x32xf32, #tpu.memory_space<vmem>>, vector<16x32xf32>
    tpu.vector_store %arg8[%c0_23, %c0_24], %50 {strides = array<i32>} : memref<16x32xf32, #tpu.memory_space<vmem>>, vector<16x32xf32>,
    return
  }
  func.func @transform_0(%arg0: i32) -> (i32, i32) {
    %c0_i32 = arith.constant 0 : i32
    %c0_i32_0 = arith.constant 0 : i32
    return %arg0, %c0_i32 : i32, i32
  }
  func.func @transform_1(%arg0: i32) -> (i32, i32) {
    %c0_i32 = arith.constant 0 : i32
    %c0_i32_0 = arith.constant 0 : i32
    %c0_i32_1 = arith.constant 0 : i32
    return %c0_i32, %c0_i32_0 : i32, i32
  }
  func.func @transform_2(%arg0: i32) -> (i32, i32) {
    %c0_i32 = arith.constant 0 : i32
    %c0_i32_0 = arith.constant 0 : i32
    %c0_i32_1 = arith.constant 0 : i32
    return %c0_i32, %c0_i32_0 : i32, i32
  }
  func.func @transform_3(%arg0: i32) -> (i32, i32) {
    %c0_i32 = arith.constant 0 : i32
    %c0_i32_0 = arith.constant 0 : i32
    %c0_i32_1 = arith.constant 0 : i32
    return %c0_i32, %c0_i32_0 : i32, i32
  }
  func.func @transform_4(%arg0: i32) -> (i32, i32) {
    %c0_i32 = arith.constant 0 : i32
    %c0_i32_0 = arith.constant 0 : i32
    %c0_i32_1 = arith.constant 0 : i32
    return %c0_i32, %c0_i32_0 : i32, i32
  }
  func.func @transform_5(%arg0: i32) -> (i32, i32) {
    %c0_i32 = arith.constant 0 : i32
    %c0_i32_0 = arith.constant 0 : i32
    %c0_i32_1 = arith.constant 0 : i32
    return %c0_i32, %c0_i32_0 : i32, i32
  }
  func.func @transform_6(%arg0: i32) -> (i32, i32) {
    %c0_i32 = arith.constant 0 : i32
    %c0_i32_0 = arith.constant 0 : i32
    %c0_i32_1 = arith.constant 0 : i32
    return %c0_i32, %c0_i32_0 : i32, i32
  }
  func.func @transform_7(%arg0: i32) -> (i32, i32) {
    %c0_i32 = arith.constant 0 : i32
    %c0_i32_0 = arith.constant 0 : i32
    return %arg0, %c0_i32 : i32, i32
  }
}

module attributes {stable_mosaic.version = 11 : i64} {
  func.func @_ffn_kernel(%arg0: i32, %arg1: memref<16x32xf32, #tpu.memory_space<vmem>>, %arg2: memref<1x32xf32, #tpu.memory_space<vmem>>, %arg3: memref<1x32xf32, #tpu.memory_space<vmem>>, %arg4: memref<32x256xbf16, #tpu.memory_space<vmem>>, %arg5: memref<1x256xf32, #tpu.memory_space<vmem>>, %arg6: memref<128x32xbf16, #tpu.memory_space<vmem>>, %arg7: memref<1x32xf32, #tpu.memory_space<vmem>>, %arg8: memref<16x32xf32, #tpu.memory_space<vmem>>) attributes {dimension_semantics = [#tpu.dimension_semantics<parallel>], iteration_bounds = array<i64: 1>, scalar_prefetch = 0 : i64, scratch_operands = 0 : i64, tpu.core_type = #tpu.core_type<tc>, window_params = [{transform_indices = @transform_0, window_bounds = array<i64: 16, 32>}, {pipeline_mode = #tpu.pipeline_mode<synchronous>, transform_indices = @transform_1, window_bounds = array<i64: 1, 32>}, {pipeline_mode = #tpu.pipeline_mode<synchronous>, transform_indices = @transform_2, window_bounds = array<i64: 1, 32>}, {pipeline_mode = #tpu.pipeline_mode<synchronous>, transform_indices = @transform_3, window_bounds = array<i64: 32, 256>}, {pipeline_mode = #tpu.pipeline_mode<synchronous>, transform_indices = @transform_4, window_bounds = array<i64: 1, 256>}, {pipeline_mode = #tpu.pipeline_mode<synchronous>, transform_indices = @transform_5, window_bounds = array<i64: 128, 32>}, {pipeline_mode = #tpu.pipeline_mode<synchronous>, transform_indices = @transform_6, window_bounds = array<i64: 1, 32>}, {transform_indices = @transform_7, window_bounds = array<i64: 16, 32>}]} {
    %c0 = arith.constant 0 : index
    %c0_0 = arith.constant 0 : index
    %0 = vector.load %arg1[%c0, %c0_0] : memref<16x32xf32, #tpu.memory_space<vmem>>, vector<16x32xf32>
    %cst = arith.constant dense<0.000000e+00> : vector<16xf32>
    %1 = vector.multi_reduction <add>, %0, %cst [1] : vector<16x32xf32> to vector<16xf32>
    %2 = vector.shape_cast %1 : vector<16xf32> to vector<16x1xf32>
    %cst_1 = arith.constant 3.200000e+01 : f32
    %3 = vector.broadcast %cst_1 : f32 to vector<16x1xf32>
    %4 = arith.divf %2, %3 : vector<16x1xf32>
    %5 = vector.broadcast %4 : vector<16x1xf32> to vector<16x32xf32>
    %6 = arith.subf %0, %5 : vector<16x32xf32>
    %7 = arith.mulf %6, %6 : vector<16x32xf32>
    %cst_2 = arith.constant dense<0.000000e+00> : vector<16xf32>
    %8 = vector.multi_reduction <add>, %7, %cst_2 [1] : vector<16x32xf32> to vector<16xf32>
    %9 = vector.shape_cast %8 : vector<16xf32> to vector<16x1xf32>
    %cst_3 = arith.constant 3.200000e+01 : f32
    %10 = vector.broadcast %cst_3 : f32 to vector<16x1xf32>
    %11 = arith.divf %9, %10 : vector<16x1xf32>
    %cst_4 = arith.constant 9.99999974E-6 : f32
    %12 = vector.broadcast %cst_4 : f32 to vector<16x1xf32>
    %13 = arith.addf %11, %12 : vector<16x1xf32>
    %14 = math.rsqrt %13 : vector<16x1xf32>
    %15 = vector.broadcast %14 : vector<16x1xf32> to vector<16x32xf32>
    %16 = arith.mulf %6, %15 : vector<16x32xf32>
    %c0_5 = arith.constant 0 : index
    %c0_6 = arith.constant 0 : index
    %17 = vector.load %arg2[%c0_5, %c0_6] : memref<1x32xf32, #tpu.memory_space<vmem>>, vector<1x32xf32>
    %18 = vector.broadcast %17 : vector<1x32xf32> to vector<16x32xf32>
    %19 = arith.mulf %16, %18 : vector<16x32xf32>
    %c0_7 = arith.constant 0 : index
    %c0_8 = arith.constant 0 : index
    %20 = vector.load %arg3[%c0_7, %c0_8] : memref<1x32xf32, #tpu.memory_space<vmem>>, vector<1x32xf32>
    %21 = vector.broadcast %20 : vector<1x32xf32> to vector<16x32xf32>
    %22 = arith.addf %19, %21 : vector<16x32xf32>
    %23 = arith.truncf %22 : vector<16x32xf32> to vector<16x32xbf16>
    %c0_9 = arith.constant 0 : index
    %c0_10 = arith.constant 0 : index
    %24 = vector.load %arg4[%c0_9, %c0_10] : memref<32x256xbf16, #tpu.memory_space<vmem>>, vector<32x256xbf16>
    %cst_11 = arith.constant dense<0.000000e+00> : vector<16x256xf32>
    %25 = tpu.matmul %23, %24, %cst_11 {dimension_numbers = #tpu.dot_dimension_numbers<[1], [0], [0], [1], [0, 0, 1, 1], [], []>} : vector<16x32xbf16>, vector<32x256xbf16>, vector<16x256xf32> -> vector<16x256xf32>
    %c0_12 = arith.constant 0 : index
    %c0_13 = arith.constant 0 : index
    %26 = vector.load %arg5[%c0_12, %c0_13] : memref<1x256xf32, #tpu.memory_space<vmem>>, vector<1x256xf32>
    %27 = vector.broadcast %26 : vector<1x256xf32> to vector<16x256xf32>
    %28 = arith.addf %25, %27 : vector<16x256xf32>
    %29 = vector.extract_strided_slice %28 {offsets = [0, 0], sizes = [16, 128], strides = [1, 1]} : vector<16x256xf32> to vector<16x128xf32>
    %30 = vector.extract_strided_slice %28 {offsets = [0, 128], sizes = [16, 128], strides = [1, 1]} : vector<16x256xf32> to vector<16x128xf32>
    %cst_14 = arith.constant 5.000000e-01 : f32
    %31 = vector.broadcast %cst_14 : f32 to vector<16x128xf32>
    %32 = arith.mulf %31, %30 : vector<16x128xf32>
    %33 = arith.mulf %30, %30 : vector<16x128xf32>
    %34 = arith.mulf %33, %30 : vector<16x128xf32>
    %cst_15 = arith.constant 4.471500e-02 : f32
    %35 = vector.broadcast %cst_15 : f32 to vector<16x128xf32>
    %36 = arith.mulf %35, %34 : vector<16x128xf32>
    %37 = arith.addf %30, %36 : vector<16x128xf32>
    %cst_16 = arith.constant 0.797884583 : f32
    %38 = vector.broadcast %cst_16 : f32 to vector<16x128xf32>
    %39 = arith.mulf %38, %37 : vector<16x128xf32>
    %40 = math.tanh %39 : vector<16x128xf32>
    %cst_17 = arith.constant 1.000000e+00 : f32
    %41 = vector.broadcast %cst_17 : f32 to vector<16x128xf32>
    %42 = arith.addf %41, %40 : vector<16x128xf32>
    %43 = arith.mulf %32, %42 : vector<16x128xf32>
    %44 = arith.mulf %29, %43 : vector<16x128xf32>
    %45 = arith.truncf %44 : vector<16x128xf32> to vector<16x128xbf16>
    %c0_18 = arith.constant 0 : index
    %c0_19 = arith.constant 0 : index
    %46 = vector.load %arg6[%c0_18, %c0_19] : memref<128x32xbf16, #tpu.memory_space<vmem>>, vector<128x32xbf16>
    %cst_20 = arith.constant dense<0.000000e+00> : vector<16x32xf32>
    %47 = tpu.matmul %45, %46, %cst_20 {dimension_numbers = #tpu.dot_dimension_numbers<[1], [0], [0], [1], [0, 0, 1, 1], [], []>} : vector<16x128xbf16>, vector<128x32xbf16>, vector<16x32xf32> -> vector<16x32xf32>
    %c0_21 = arith.constant 0 : index
    %c0_22 = arith.constant 0 : index
    %48 = vector.load %arg7[%c0_21, %c0_22] : memref<1x32xf32, #tpu.memory_space<vmem>>, vector<1x32xf32>
    %49 = vector.broadcast %48 : vector<1x32xf32> to vector<16x32xf32>
    %50 = arith.addf %47, %49 : vector<16x32xf32>
    %c0_23 = arith.constant 0 : index
    %c0_24 = arith.constant 0 : index
    %51 = vector.load %arg8[%c0_23, %c0_24] : memref<16x32xf32, #tpu.memory_space<vmem>>, vector<16x32xf32>
    tpu.vector_store %arg8[%c0_23, %c0_24], %50 {strides = array<i32>} : memref<16x32xf32, #tpu.memory_space<vmem>>, vector<16x32xf32>,
    return
  }
  func.func @transform_0(%arg0: i32) -> (i32, i32) {
    %c0_i32 = arith.constant 0 : i32
    %c0_i32_0 = arith.constant 0 : i32
    return %arg0, %c0_i32 : i32, i32
  }
  func.func @transform_1(%arg0: i32) -> (i32, i32) {
    %c0_i32 = arith.constant 0 : i32
    %c0_i32_0 = arith.constant 0 : i32
    %c0_i32_1 = arith.constant 0 : i32
    return %c0_i32, %c0_i32_0 : i32, i32
  }
  func.func @transform_2(%arg0: i32) -> (i32, i32) {
    %c0_i32 = arith.constant 0 : i32
    %c0_i32_0 = arith.constant 0 : i32
    %c0_i32_1 = arith.constant 0 : i32
    return %c0_i32, %c0_i32_0 : i32, i32
  }
  func.func @transform_3(%arg0: i32) -> (i32, i32) {
    %c0_i32 = arith.constant 0 : i32
    %c0_i32_0 = arith.constant 0 : i32
    %c0_i32_1 = arith.constant 0 : i32
    return %c0_i32, %c0_i32_0 : i32, i32
  }
  func.func @transform_4(%arg0: i32) -> (i32, i32) {
    %c0_i32 = arith.constant 0 : i32
    %c0_i32_0 = arith.constant 0 : i32
    %c0_i32_1 = arith.constant 0 : i32
    return %c0_i32, %c0_i32_0 : i32, i32
  }
  func.func @transform_5(%arg0: i32) -> (i32, i32) {
    %c0_i32 = arith.constant 0 : i32
    %c0_i32_0 = arith.constant 0 : i32
    %c0_i32_1 = arith.constant 0 : i32
    return %c0_i32, %c0_i32_0 : i32, i32
  }
  func.func @transform_6(%arg0: i32) -> (i32, i32) {
    %c0_i32 = arith.constant 0 : i32
    %c0_i32_0 = arith.constant 0 : i32
    %c0_i32_1 = arith.constant 0 : i32
    return %c0_i32, %c0_i32_0 : i32, i32
  }
  func.func @transform_7(%arg0: i32) -> (i32, i32) {
    %c0_i32 = arith.constant 0 : i32
    %c0_i32_0 = arith.constant 0 : i32
    return %arg0, %c0_i32 : i32, i32
  }
}

</mosaic_0001>

<llo_original>
// kernel: tpu_custom_call.1
$region0: #{tpu_custom_call.1}
  #allocation0 [shape = 'u32[]', space=smem, size = 0x4, offset = 0x4, fixed_abs, tag = 'smem constant byte address 0x4 - core index']
  #allocation1 [shape = 'u32[72,128]{1,0:T(1,128)}', space=vmem, size = 0x9000, scoped, tag = 'internal scratch']
  %s0 = inlined_call_operand.vmem [shape: f32[16,32], index: 0, kind: input, shape index: {}]
  %s1 = inlined_call_operand.vmem [shape: f32[1,32], index: 1, kind: input, shape index: {}]
  %s2 = inlined_call_operand.vmem [shape: f32[1,32], index: 2, kind: input, shape index: {}]
  %s3 = inlined_call_operand.vmem [shape: bf16[32,256], index: 3, kind: input, shape index: {}]
  %s4 = inlined_call_operand.vmem [shape: f32[1,256], index: 4, kind: input, shape index: {}]
  %s5 = inlined_call_operand.vmem [shape: bf16[128,32], index: 5, kind: input, shape index: {}]
  %s6 = inlined_call_operand.vmem [shape: f32[1,32], index: 6, kind: input, shape index: {}]
  %s7 = inlined_call_operand.hbm [shape: f32[16,32], index: 7, kind: output, shape index: {}]
  %s8 = sld [smem:[#allocation0]]
  $region38: #{tpu_custom_call.1} parent=0
    _
  %s10 = ssub.s32 1, %s8
  %s11 = scalar_select 0, %s10, %s8
  $region1: #{tpu_custom_call.1} parent=0
    #allocation2 [shape = 'u8[8192]{0}', space=vmem, size = 0x2000, scoped, tag = 'output window, operand 0, single buffered']
    #allocation3 [shape = 's32[1]{0}', space=sflag, size = 0x4, scoped, tag = 'scoped memory for tpu_custom_call.1']
    %12 = vsyncpa [#allocation3], 0
    // Predicated region
    $region2: #{tpu_custom_call.1} parent=1 // pred_check
      _
    $region3: #{tpu_custom_call.1} parent=1 // pred_check_branch
      %14 = sbr.rel (0) target = $region5
    $region4: #{tpu_custom_call.1} parent=1 // pred_region
      _
    $region5: #{tpu_custom_call.1} parent=1 // pred_fallthru
      _
    // Predicated region
    $region6: #{tpu_custom_call.1} parent=1 // pred_check
      _
    $region7: #{tpu_custom_call.1} parent=1 // pred_check_branch
      %16 = sbr.rel (0) target = $region9
    $region8: #{tpu_custom_call.1} parent=1 // pred_region
      _
    $region9: #{tpu_custom_call.1} parent=1 // pred_fallthru
      _
    // Predicated region
    $region10: #{tpu_custom_call.1} parent=1 // pred_check
      _
    $region11: #{tpu_custom_call.1} parent=1 // pred_check_branch
      %18 = sbr.rel (0) target = $region13
    $region12: #{tpu_custom_call.1} parent=1 // pred_region
      _
    $region13: #{tpu_custom_call.1} parent=1 // pred_fallthru
      _
    // Predicated region
    $region14: #{tpu_custom_call.1} parent=1 // pred_check
      _
    $region15: #{tpu_custom_call.1} parent=1 // pred_check_branch
      %20 = sbr.rel (0) target = $region17
    $region16: #{tpu_custom_call.1} parent=1 // pred_region
      _
    $region17: #{tpu_custom_call.1} parent=1 // pred_fallthru
      _
    // Predicated region
    $region18: #{tpu_custom_call.1} parent=1 // pred_check
      _
    $region19: #{tpu_custom_call.1} parent=1 // pred_check_branch
      %22 = sbr.rel (0) target = $region21
    $region20: #{tpu_custom_call.1} parent=1 // pred_region
      _
    $region21: #{tpu_custom_call.1} parent=1 // pred_fallthru
      _
    // Predicated region
    $region22: #{tpu_custom_call.1} parent=1 // pred_check
      _
    $region23: #{tpu_custom_call.1} parent=1 // pred_check_branch
      %24 = sbr.rel (0) target = $region25
    $region24: #{tpu_custom_call.1} parent=1 // pred_region
      _
    $region25: #{tpu_custom_call.1} parent=1 // pred_fallthru
      _
    // Predicated region
    $region26: #{tpu_custom_call.1} parent=1 // pred_check
      _
    $region27: #{tpu_custom_call.1} parent=1 // pred_check_branch
      %26 = sbr.rel (0) target = $region29
    $region28: #{tpu_custom_call.1} parent=1 // pred_region
      _
    $region29: #{tpu_custom_call.1} parent=1 // pred_fallthru
      _
    %v28 = vld [vmem:[%s0] sm:$0xff]
    %v29 = vld [vmem:[%s0 + $0x8] sm:$0xff]
    %vm30 = vcmask 261120
    %v31 = vsel %vm30, %v28, 0.0
    %32 = vadd.xlane.f32.xlu0 %v31
    %v33 = vpop.xlane.xlu0 %32
    %v34 = vsel %vm30, %v29, 0.0
    %35 = vadd.xlane.f32.xlu0 %v34
    %v36 = vpop.xlane.xlu0 %35
    %v37 = vrcp.pop 32.0
    %v38 = vmul.f32 32.0, %v37
    %v39 = vsub.f32 1.0, %v38
    %v40 = vmul.f32 %v37, %v39
    %v41 = vadd.f32 %v37, %v40
    %vm42 = vweird.f32 %v37
    %v43 = vsel %vm42, %v37, %v41
    %v44 = vmul.f32 %v33, %v43
    %v45 = vmul.f32 %v36, %v43
    %v46 = vsub.f32 %v28, %v44
    %v47 = vsub.f32 %v29, %v45
    %v48 = vmul.f32 %v46, %v46
    %v49 = vmul.f32 %v47, %v47
    %v50 = vsel %vm30, %v48, 0.0
    %51 = vadd.xlane.f32.xlu0 %v50
    %v52 = vpop.xlane.xlu0 %51
    %v53 = vsel %vm30, %v49, 0.0
    %54 = vadd.xlane.f32.xlu0 %v53
    %v55 = vpop.xlane.xlu0 %54
    %v56 = vmul.f32 %v52, %v43
    %v57 = vmul.f32 %v55, %v43
    %v58 = vadd.f32 %v56, 1e-05
    %v59 = vadd.f32 %v57, 1e-05
    %v60 = vrsqrt.pop %v58
    %v61 = vmul.f32 %v60, %v58
    %v62 = vmul.f32 %v61, %v60
    %v63 = vmul.f32 0.5, %v62
    %v64 = vsub.f32 1.5, %v63
    %v65 = vmul.f32 %v60, %v64
    %vm66 = vweird.f32 %v58
    %vm67 = vweird.f32 %v60
    %vm68 = vmor %vm66, %vm67
    %v69 = vsel %vm68, %v60, %v65
    %v70 = vrsqrt.pop %v59
    %v71 = vmul.f32 %v70, %v59
    %v72 = vmul.f32 %v71, %v70
    %v73 = vmul.f32 0.5, %v72
    %v74 = vsub.f32 1.5, %v73
    %v75 = vmul.f32 %v70, %v74
    %vm76 = vweird.f32 %v59
    %vm77 = vweird.f32 %v70
    %vm78 = vmor %vm76, %vm77
    %v79 = vsel %vm78, %v70, %v75
    %v80 = vmul.f32 %v46, %v69
    %v81 = vmul.f32 %v47, %v79
    %v82 = vld [vmem:[%s1] sm:$0x1]
    %v84 = vperm.slane %v82, 0
    %v86 = vmul.f32 %v80, %v84
    %v87 = vmul.f32 %v81, %v84
    %v88 = vld [vmem:[%s2] sm:$0x1]
    %v90 = vperm.slane %v88, 0
    %v92 = vadd.f32 %v86, %v90
    %v93 = vadd.f32 %v87, %v90
    %v94 = vpack.c.bf16 %v93, %v92
    %v95 = vld [vmem:[%s3] sm:$0xff]
    %v96 = vld [vmem:[%s3 + $0x8] sm:$0xff]
    %v97 = vld [vmem:[%s3 + $0x10] sm:$0xff]
    %v98 = vld [vmem:[%s3 + $0x18] sm:$0xff]
    %v99 = vld [vmem:[%s4] sm:$0x3]
    %v101 = vperm.slane %v99, 0
    %v102 = vperm.slane %v99, 1
    %v109 = vunpack.c.l.b16 %v95
    %v110 = vunpack.c.h.b16 %v95
    %v111 = vunpack.c.l.b16 %v96
    %v112 = vunpack.c.h.b16 %v96
    %v113 = vunpack.c.l.b16 %v97
    %v114 = vunpack.c.h.b16 %v97
    %v115 = vunpack.c.l.b16 %v98
    %v116 = vunpack.c.h.b16 %v98
    %v117 = vpack.c.b16 %v111, %v109
    %v118 = vpack.c.b16 %v112, %v110
    %v119 = vpack.c.b16 %v115, %v113
    %v120 = vpack.c.b16 %v116, %v114
    %v126 = vsel %vm30, %v94, 0
    %128 = vmatpush.bf16.msra.mxu0 0
    %129 = vmatpush.bf16.msra.mxu0 0
    %130 = vmatpush.bf16.msra.mxu0 0
    %131 = vmatpush.bf16.msra.mxu0 0
    %132 = vmatpush.bf16.msra.mxu0 0
    %133 = vmatpush.bf16.msra.mxu0 0
    %134 = vmatpush.bf16.msra.mxu0 %v119
    %135 = vmatpush.bf16.msra.mxu0 %v117
    %136 = vmatmul.bf16.gmra.mxu0 %v126
    %v137 = vpop.f32.mrf.mxu0
    %v138 = vadd.f32 %v101, %v137
    %v139 = vpop.f32.mrf.mxu0
    %v140 = vadd.f32 %v101, %v139
    %141 = vdwg.mxu0
    %142 = vmatpush.bf16.msra.mxu0 0
    %143 = vmatpush.bf16.msra.mxu0 0
    %144 = vmatpush.bf16.msra.mxu0 0
    %145 = vmatpush.bf16.msra.mxu0 0
    %146 = vmatpush.bf16.msra.mxu0 0
    %147 = vmatpush.bf16.msra.mxu0 0
    %148 = vmatpush.bf16.msra.mxu0 %v120
    %149 = vmatpush.bf16.msra.mxu0 %v118
    %150 = vmatmul.bf16.gmra.mxu0 %v126
    %v151 = vpop.f32.mrf.mxu0
    %v152 = vadd.f32 %v102, %v151
    %v153 = vpop.f32.mrf.mxu0
    %v154 = vadd.f32 %v102, %v153
    %155 = vdwg.mxu0
    %v156 = vmul.f32 %v152, 0.5
    %v157 = vmul.f32 %v154, 0.5
    %v158 = vmul.f32 %v152, %v152
    %v159 = vmul.f32 %v154, %v154
    %v160 = vmul.f32 %v158, %v152
    %v161 = vmul.f32 %v159, %v154
    %v162 = vmul.f32 %v160, 0.044715
    %v163 = vmul.f32 %v161, 0.044715
    %v164 = vadd.f32 %v152, %v162
    %v165 = vadd.f32 %v154, %v163
    %v166 = vmul.f32 %v164, 0.7978846
    %v167 = vmul.f32 %v165, 0.7978846
    %v168 = vtanh.pop %v166
    %v169 = vtanh.pop %v167
    %v170 = vadd.f32 %v168, 1.0
    %v171 = vadd.f32 %v169, 1.0
    %v172 = vmul.f32 %v156, %v170
    %v173 = vmul.f32 %v157, %v171
    %v174 = vmul.f32 %v138, %v172
    %v175 = vmul.f32 %v140, %v173
    %v176 = vpack.c.bf16 %v175, %v174
    %v177 = vld [vmem:[%s5] sm:$0xf]
    %v178 = vld [vmem:[%s5 + $0x4] sm:$0xf]
    %v179 = vld [vmem:[%s5 + $0x8] sm:$0xf]
    %v180 = vld [vmem:[%s5 + $0xc] sm:$0xf]
    %v181 = vld [vmem:[%s5 + $0x10] sm:$0xf]
    %v182 = vld [vmem:[%s5 + $0x14] sm:$0xf]
    %v183 = vld [vmem:[%s5 + $0x18] sm:$0xf]
    %v184 = vld [vmem:[%s5 + $0x1c] sm:$0xf]
    %v185 = vld [vmem:[%s5 + $0x20] sm:$0xf]
    %v186 = vld [vmem:[%s5 + $0x24] sm:$0xf]
    %v187 = vld [vmem:[%s5 + $0x28] sm:$0xf]
    %v188 = vld [vmem:[%s5 + $0x2c] sm:$0xf]
    %v189 = vld [vmem:[%s5 + $0x30] sm:$0xf]
    %v190 = vld [vmem:[%s5 + $0x34] sm:$0xf]
    %v191 = vld [vmem:[%s5 + $0x38] sm:$0xf]
    %v192 = vld [vmem:[%s5 + $0x3c] sm:$0xf]
    %v193 = vld [vmem:[%s6] sm:$0x1]
    %v195 = vperm.slane %v193, 0
    %v213 = vunpack.c.l.b16 %v177
    %v214 = vunpack.c.l.b16 %v178
    %v215 = vunpack.c.l.b16 %v179
    %v216 = vunpack.c.l.b16 %v180
    %v217 = vunpack.c.l.b16 %v181
    %v218 = vunpack.c.l.b16 %v182
    %v219 = vunpack.c.l.b16 %v183
    %v220 = vunpack.c.l.b16 %v184
    %v221 = vunpack.c.l.b16 %v185
    %v222 = vunpack.c.l.b16 %v186
    %v223 = vunpack.c.l.b16 %v187
    %v224 = vunpack.c.l.b16 %v188
    %v225 = vunpack.c.l.b16 %v189
    %v226 = vunpack.c.l.b16 %v190
    %v227 = vunpack.c.l.b16 %v191
    %v228 = vunpack.c.l.b16 %v192
    %v229 = vpack.c.b16 %v214, %v213
    %v230 = vpack.c.b16 %v216, %v215
    %v231 = vpack.c.b16 %v218, %v217
    %v232 = vpack.c.b16 %v220, %v219
    %v233 = vpack.c.b16 %v222, %v221
    %v234 = vpack.c.b16 %v224, %v223
    %v235 = vpack.c.b16 %v226, %v225
    %v236 = vpack.c.b16 %v228, %v227
    %245 = vmatpush.bf16.msra.mxu0 %v236
    %246 = vmatpush.bf16.msra.mxu0 %v235
    %247 = vmatpush.bf16.msra.mxu0 %v234
    %248 = vmatpush.bf16.msra.mxu0 %v233
    %249 = vmatpush.bf16.msra.mxu0 %v232
    %250 = vmatpush.bf16.msra.mxu0 %v231
    %251 = vmatpush.bf16.msra.mxu0 %v230
    %252 = vmatpush.bf16.msra.mxu0 %v229
    %253 = vmatmul.bf16.gmra.mxu0 %v176
    %v254 = vpop.f32.mrf.mxu0
    %v255 = vadd.f32 %v195, %v254
    %v256 = vpop.f32.mrf.mxu0
    %v257 = vadd.f32 %v195, %v256
    %258 = vdwg.mxu0
    %259 = vst.msk [vmem:[#allocation2] sm:$0xff] %vm30, %v255
    %260 = vst.msk [vmem:[#allocation2 + $0x8] sm:$0xff] %vm30, %v257
    // Predicated region
    $region30: #{tpu_custom_call.1} parent=1 // pred_check
      _
    $region31: #{tpu_custom_call.1} parent=1 // pred_check_branch
      %262 = sbr.rel (0) target = $region33
    $region32: #{tpu_custom_call.1} parent=1 // pred_region
      %264 = vsyncadd [#allocation3], 0
      %s265 = sshll.u32 [#allocation2], 4
      %s266 = int_to_ptr.vmem [resolvable:$true] %s265
      %s267 = sshll.u32 %s7, 4
      %s268 = int_to_ptr.hbm [resolvable:$true] %s267
      %273 = dma.vmem_to_hbm [thread:$0]  %s266, 256, %s268, [#allocation3], 128, 128, 8
    $region33: #{tpu_custom_call.1} parent=1 // pred_fallthru
      _
    // Predicated region
    $region34: #{tpu_custom_call.1} parent=1 // pred_check
      _
    $region35: #{tpu_custom_call.1} parent=1 // pred_check_branch
      %275 = sbr.rel (0) target = $region37
    $region36: #{tpu_custom_call.1} parent=1 // pred_region
      %277 = dma.done [#allocation3], 256
    $region37: #{tpu_custom_call.1} parent=1 // pred_fallthru
      _
    %278 = vsyncpa [#allocation3], 1

// kernel: tpu_custom_call.1
$region0: #{tpu_custom_call.1}
  #allocation0 [shape = 'u32[]', space=smem, size = 0x4, offset = 0x4, fixed_abs, tag = 'smem constant byte address 0x4 - core index']
  #allocation1 [shape = 'u32[72,128]{1,0:T(1,128)}', space=vmem, size = 0x9000, scoped, tag = 'internal scratch']
  %s0 = inlined_call_operand.vmem [shape: f32[16,32], index: 0, kind: input, shape index: {}]
  %s1 = inlined_call_operand.vmem [shape: f32[1,32], index: 1, kind: input, shape index: {}]
  %s2 = inlined_call_operand.vmem [shape: f32[1,32], index: 2, kind: input, shape index: {}]
  %s3 = inlined_call_operand.vmem [shape: bf16[32,256], index: 3, kind: input, shape index: {}]
  %s4 = inlined_call_operand.vmem [shape: f32[1,256], index: 4, kind: input, shape index: {}]
  %s5 = inlined_call_operand.vmem [shape: bf16[128,32], index: 5, kind: input, shape index: {}]
  %s6 = inlined_call_operand.vmem [shape: f32[1,32], index: 6, kind: input, shape index: {}]
  %s7 = inlined_call_operand.hbm [shape: f32[16,32], index: 7, kind: output, shape index: {}]
  %s8 = sld [smem:[#allocation0]]
  $region38: #{tpu_custom_call.1} parent=0
    _
  %s10 = ssub.s32 1, %s8
  %s11 = scalar_select 0, %s10, %s8
  $region1: #{tpu_custom_call.1} parent=0
    #allocation2 [shape = 'u8[8192]{0}', space=vmem, size = 0x2000, scoped, tag = 'output window, operand 0, single buffered']
    #allocation3 [shape = 's32[1]{0}', space=sflag, size = 0x4, scoped, tag = 'scoped memory for tpu_custom_call.1']
    %12 = vsyncpa [#allocation3], 0
    // Predicated region
    $region2: #{tpu_custom_call.1} parent=1 // pred_check
      _
    $region3: #{tpu_custom_call.1} parent=1 // pred_check_branch
      %14 = sbr.rel (0) target = $region5
    $region4: #{tpu_custom_call.1} parent=1 // pred_region
      _
    $region5: #{tpu_custom_call.1} parent=1 // pred_fallthru
      _
    // Predicated region
    $region6: #{tpu_custom_call.1} parent=1 // pred_check
      _
    $region7: #{tpu_custom_call.1} parent=1 // pred_check_branch
      %16 = sbr.rel (0) target = $region9
    $region8: #{tpu_custom_call.1} parent=1 // pred_region
      _
    $region9: #{tpu_custom_call.1} parent=1 // pred_fallthru
      _
    // Predicated region
    $region10: #{tpu_custom_call.1} parent=1 // pred_check
      _
    $region11: #{tpu_custom_call.1} parent=1 // pred_check_branch
      %18 = sbr.rel (0) target = $region13
    $region12: #{tpu_custom_call.1} parent=1 // pred_region
      _
    $region13: #{tpu_custom_call.1} parent=1 // pred_fallthru
      _
    // Predicated region
    $region14: #{tpu_custom_call.1} parent=1 // pred_check
      _
    $region15: #{tpu_custom_call.1} parent=1 // pred_check_branch
      %20 = sbr.rel (0) target = $region17
    $region16: #{tpu_custom_call.1} parent=1 // pred_region
      _
    $region17: #{tpu_custom_call.1} parent=1 // pred_fallthru
      _
    // Predicated region
    $region18: #{tpu_custom_call.1} parent=1 // pred_check
      _
    $region19: #{tpu_custom_call.1} parent=1 // pred_check_branch
      %22 = sbr.rel (0) target = $region21
    $region20: #{tpu_custom_call.1} parent=1 // pred_region
      _
    $region21: #{tpu_custom_call.1} parent=1 // pred_fallthru
      _
    // Predicated region
    $region22: #{tpu_custom_call.1} parent=1 // pred_check
      _
    $region23: #{tpu_custom_call.1} parent=1 // pred_check_branch
      %24 = sbr.rel (0) target = $region25
    $region24: #{tpu_custom_call.1} parent=1 // pred_region
      _
    $region25: #{tpu_custom_call.1} parent=1 // pred_fallthru
      _
    // Predicated region
    $region26: #{tpu_custom_call.1} parent=1 // pred_check
      _
    $region27: #{tpu_custom_call.1} parent=1 // pred_check_branch
      %26 = sbr.rel (0) target = $region29
    $region28: #{tpu_custom_call.1} parent=1 // pred_region
      _
    $region29: #{tpu_custom_call.1} parent=1 // pred_fallthru
      _
    %v28 = vld [vmem:[%s0] sm:$0xff]
    %v29 = vld [vmem:[%s0 + $0x8] sm:$0xff]
    %vm30 = vcmask 261120
    %v31 = vsel %vm30, %v28, 0.0
    %32 = vadd.xlane.f32.xlu0 %v31
    %v33 = vpop.xlane.xlu0 %32
    %v34 = vsel %vm30, %v29, 0.0
    %35 = vadd.xlane.f32.xlu0 %v34
    %v36 = vpop.xlane.xlu0 %35
    %v37 = vrcp.pop 32.0
    %v38 = vmul.f32 32.0, %v37
    %v39 = vsub.f32 1.0, %v38
    %v40 = vmul.f32 %v37, %v39
    %v41 = vadd.f32 %v37, %v40
    %vm42 = vweird.f32 %v37
    %v43 = vsel %vm42, %v37, %v41
    %v44 = vmul.f32 %v33, %v43
    %v45 = vmul.f32 %v36, %v43
    %v46 = vsub.f32 %v28, %v44
    %v47 = vsub.f32 %v29, %v45
    %v48 = vmul.f32 %v46, %v46
    %v49 = vmul.f32 %v47, %v47
    %v50 = vsel %vm30, %v48, 0.0
    %51 = vadd.xlane.f32.xlu0 %v50
    %v52 = vpop.xlane.xlu0 %51
    %v53 = vsel %vm30, %v49, 0.0
    %54 = vadd.xlane.f32.xlu0 %v53
    %v55 = vpop.xlane.xlu0 %54
    %v56 = vmul.f32 %v52, %v43
    %v57 = vmul.f32 %v55, %v43
    %v58 = vadd.f32 %v56, 1e-05
    %v59 = vadd.f32 %v57, 1e-05
    %v60 = vrsqrt.pop %v58
    %v61 = vmul.f32 %v60, %v58
    %v62 = vmul.f32 %v61, %v60
    %v63 = vmul.f32 0.5, %v62
    %v64 = vsub.f32 1.5, %v63
    %v65 = vmul.f32 %v60, %v64
    %vm66 = vweird.f32 %v58
    %vm67 = vweird.f32 %v60
    %vm68 = vmor %vm66, %vm67
    %v69 = vsel %vm68, %v60, %v65
    %v70 = vrsqrt.pop %v59
    %v71 = vmul.f32 %v70, %v59
    %v72 = vmul.f32 %v71, %v70
    %v73 = vmul.f32 0.5, %v72
    %v74 = vsub.f32 1.5, %v73
    %v75 = vmul.f32 %v70, %v74
    %vm76 = vweird.f32 %v59
    %vm77 = vweird.f32 %v70
    %vm78 = vmor %vm76, %vm77
    %v79 = vsel %vm78, %v70, %v75
    %v80 = vmul.f32 %v46, %v69
    %v81 = vmul.f32 %v47, %v79
    %v82 = vld [vmem:[%s1] sm:$0x1]
    %v84 = vperm.slane %v82, 0
    %v86 = vmul.f32 %v80, %v84
    %v87 = vmul.f32 %v81, %v84
    %v88 = vld [vmem:[%s2] sm:$0x1]
    %v90 = vperm.slane %v88, 0
    %v92 = vadd.f32 %v86, %v90
    %v93 = vadd.f32 %v87, %v90
    %v94 = vpack.c.bf16 %v93, %v92
    %v95 = vld [vmem:[%s3] sm:$0xff]
    %v96 = vld [vmem:[%s3 + $0x8] sm:$0xff]
    %v97 = vld [vmem:[%s3 + $0x10] sm:$0xff]
    %v98 = vld [vmem:[%s3 + $0x18] sm:$0xff]
    %v99 = vld [vmem:[%s4] sm:$0x3]
    %v101 = vperm.slane %v99, 0
    %v102 = vperm.slane %v99, 1
    %v109 = vunpack.c.l.b16 %v95
    %v110 = vunpack.c.h.b16 %v95
    %v111 = vunpack.c.l.b16 %v96
    %v112 = vunpack.c.h.b16 %v96
    %v113 = vunpack.c.l.b16 %v97
    %v114 = vunpack.c.h.b16 %v97
    %v115 = vunpack.c.l.b16 %v98
    %v116 = vunpack.c.h.b16 %v98
    %v117 = vpack.c.b16 %v111, %v109
    %v118 = vpack.c.b16 %v112, %v110
    %v119 = vpack.c.b16 %v115, %v113
    %v120 = vpack.c.b16 %v116, %v114
    %v126 = vsel %vm30, %v94, 0
    %128 = vmatpush.bf16.msra.mxu0 0
    %129 = vmatpush.bf16.msra.mxu0 0
    %130 = vmatpush.bf16.msra.mxu0 0
    %131 = vmatpush.bf16.msra.mxu0 0
    %132 = vmatpush.bf16.msra.mxu0 0
    %133 = vmatpush.bf16.msra.mxu0 0
    %134 = vmatpush.bf16.msra.mxu0 %v119
    %135 = vmatpush.bf16.msra.mxu0 %v117
    %136 = vmatmul.bf16.gmra.mxu0 %v126
    %v137 = vpop.f32.mrf.mxu0
    %v138 = vadd.f32 %v101, %v137
    %v139 = vpop.f32.mrf.mxu0
    %v140 = vadd.f32 %v101, %v139
    %141 = vdwg.mxu0
    %142 = vmatpush.bf16.msra.mxu0 0
    %143 = vmatpush.bf16.msra.mxu0 0
    %144 = vmatpush.bf16.msra.mxu0 0
    %145 = vmatpush.bf16.msra.mxu0 0
    %146 = vmatpush.bf16.msra.mxu0 0
    %147 = vmatpush.bf16.msra.mxu0 0
    %148 = vmatpush.bf16.msra.mxu0 %v120
    %149 = vmatpush.bf16.msra.mxu0 %v118
    %150 = vmatmul.bf16.gmra.mxu0 %v126
    %v151 = vpop.f32.mrf.mxu0
    %v152 = vadd.f32 %v102, %v151
    %v153 = vpop.f32.mrf.mxu0
    %v154 = vadd.f32 %v102, %v153
    %155 = vdwg.mxu0
    %v156 = vmul.f32 %v152, 0.5
    %v157 = vmul.f32 %v154, 0.5
    %v158 = vmul.f32 %v152, %v152
    %v159 = vmul.f32 %v154, %v154
    %v160 = vmul.f32 %v158, %v152
    %v161 = vmul.f32 %v159, %v154
    %v162 = vmul.f32 %v160, 0.044715
    %v163 = vmul.f32 %v161, 0.044715
    %v164 = vadd.f32 %v152, %v162
    %v165 = vadd.f32 %v154, %v163
    %v166 = vmul.f32 %v164, 0.7978846
    %v167 = vmul.f32 %v165, 0.7978846
    %v168 = vtanh.pop %v166
    %v169 = vtanh.pop %v167
    %v170 = vadd.f32 %v168, 1.0
    %v171 = vadd.f32 %v169, 1.0
    %v172 = vmul.f32 %v156, %v170
    %v173 = vmul.f32 %v157, %v171
    %v174 = vmul.f32 %v138, %v172
    %v175 = vmul.f32 %v140, %v173
    %v176 = vpack.c.bf16 %v175, %v174
    %v177 = vld [vmem:[%s5] sm:$0xf]
    %v178 = vld [vmem:[%s5 + $0x4] sm:$0xf]
    %v179 = vld [vmem:[%s5 + $0x8] sm:$0xf]
    %v180 = vld [vmem:[%s5 + $0xc] sm:$0xf]
    %v181 = vld [vmem:[%s5 + $0x10] sm:$0xf]
    %v182 = vld [vmem:[%s5 + $0x14] sm:$0xf]
    %v183 = vld [vmem:[%s5 + $0x18] sm:$0xf]
    %v184 = vld [vmem:[%s5 + $0x1c] sm:$0xf]
    %v185 = vld [vmem:[%s5 + $0x20] sm:$0xf]
    %v186 = vld [vmem:[%s5 + $0x24] sm:$0xf]
    %v187 = vld [vmem:[%s5 + $0x28] sm:$0xf]
    %v188 = vld [vmem:[%s5 + $0x2c] sm:$0xf]
    %v189 = vld [vmem:[%s5 + $0x30] sm:$0xf]
    %v190 = vld [vmem:[%s5 + $0x34] sm:$0xf]
    %v191 = vld [vmem:[%s5 + $0x38] sm:$0xf]
    %v192 = vld [vmem:[%s5 + $0x3c] sm:$0xf]
    %v193 = vld [vmem:[%s6] sm:$0x1]
    %v195 = vperm.slane %v193, 0
    %v213 = vunpack.c.l.b16 %v177
    %v214 = vunpack.c.l.b16 %v178
    %v215 = vunpack.c.l.b16 %v179
    %v216 = vunpack.c.l.b16 %v180
    %v217 = vunpack.c.l.b16 %v181
    %v218 = vunpack.c.l.b16 %v182
    %v219 = vunpack.c.l.b16 %v183
    %v220 = vunpack.c.l.b16 %v184
    %v221 = vunpack.c.l.b16 %v185
    %v222 = vunpack.c.l.b16 %v186
    %v223 = vunpack.c.l.b16 %v187
    %v224 = vunpack.c.l.b16 %v188
    %v225 = vunpack.c.l.b16 %v189
    %v226 = vunpack.c.l.b16 %v190
    %v227 = vunpack.c.l.b16 %v191
    %v228 = vunpack.c.l.b16 %v192
    %v229 = vpack.c.b16 %v214, %v213
    %v230 = vpack.c.b16 %v216, %v215
    %v231 = vpack.c.b16 %v218, %v217
    %v232 = vpack.c.b16 %v220, %v219
    %v233 = vpack.c.b16 %v222, %v221
    %v234 = vpack.c.b16 %v224, %v223
    %v235 = vpack.c.b16 %v226, %v225
    %v236 = vpack.c.b16 %v228, %v227
    %245 = vmatpush.bf16.msra.mxu0 %v236
    %246 = vmatpush.bf16.msra.mxu0 %v235
    %247 = vmatpush.bf16.msra.mxu0 %v234
    %248 = vmatpush.bf16.msra.mxu0 %v233
    %249 = vmatpush.bf16.msra.mxu0 %v232
    %250 = vmatpush.bf16.msra.mxu0 %v231
    %251 = vmatpush.bf16.msra.mxu0 %v230
    %252 = vmatpush.bf16.msra.mxu0 %v229
    %253 = vmatmul.bf16.gmra.mxu0 %v176
    %v254 = vpop.f32.mrf.mxu0
    %v255 = vadd.f32 %v195, %v254
    %v256 = vpop.f32.mrf.mxu0
    %v257 = vadd.f32 %v195, %v256
    %258 = vdwg.mxu0
    %259 = vst.msk [vmem:[#allocation2] sm:$0xff] %vm30, %v255
    %260 = vst.msk [vmem:[#allocation2 + $0x8] sm:$0xff] %vm30, %v257
    // Predicated region
    $region30: #{tpu_custom_call.1} parent=1 // pred_check
      _
    $region31: #{tpu_custom_call.1} parent=1 // pred_check_branch
      %262 = sbr.rel (0) target = $region33
    $region32: #{tpu_custom_call.1} parent=1 // pred_region
      %264 = vsyncadd [#allocation3], 0
      %s265 = sshll.u32 [#allocation2], 4
      %s266 = int_to_ptr.vmem [resolvable:$true] %s265
      %s267 = sshll.u32 %s7, 4
      %s268 = int_to_ptr.hbm [resolvable:$true] %s267
      %273 = dma.vmem_to_hbm [thread:$0]  %s266, 256, %s268, [#allocation3], 128, 128, 8
    $region33: #{tpu_custom_call.1} parent=1 // pred_fallthru
      _
    // Predicated region
    $region34: #{tpu_custom_call.1} parent=1 // pred_check
      _
    $region35: #{tpu_custom_call.1} parent=1 // pred_check_branch
      %275 = sbr.rel (0) target = $region37
    $region36: #{tpu_custom_call.1} parent=1 // pred_region
      %277 = dma.done [#allocation3], 256
    $region37: #{tpu_custom_call.1} parent=1 // pred_fallthru
      _
    %278 = vsyncpa [#allocation3], 1

</llo_original>
